<compile_context>
chip_gen: v5e
topology: v5e:2x2
jax: 0.10.0
libtpu: 0.0.40
codegen_flags: <defaults>
</compile_context>

<pallas_src>
import jax
import jax.numpy as jnp
from jax.experimental import pallas as pl
from jax.experimental.pallas import tpu as pltpu

K = 8
C1_IN, C1_OUT = 1, 2
C3_IN, C3_OUT = 4, 8
F = C3_OUT * K * K          # 512 flattened (co, kh, kw) output features

# Fused-weight row layout, shape (8, F):
#   row 0      : w1 (channel-tiled x4)        -> multiplies x1
#   rows 1..4  : w3                           -> multiply x2[:, 0..3]
#   row 5      : ones                         -> multiplies x3 (broadcast add)
#   row 6      : b1(tiled) + b3               -> accumulator init (bias)
#   row 7      : zeros (sublane-layout pad only; never touched in compute)
_ROW_X1, _ROW_X2, _ROW_X3, _ROW_B = 0, 1, 5, 6


def _fused_kernel(x1_ref, x2_ref, x3_ref, w_ref, o_ref):
    w = w_ref[...]                                        # (8, F) f32, resident
    # Bias row initialises the accumulator -> no ones/pad FMA terms.
    acc = w[_ROW_B:_ROW_B + 1, :] + x1_ref[...] * w[_ROW_X1:_ROW_X1 + 1, :]
    x2 = x2_ref[...]                                      # (tm, 4)
    for c in range(C3_IN):                                # static unroll: 4 FMAs
        acc = acc + x2[:, c:c + 1] * w[_ROW_X2 + c:_ROW_X2 + c + 1, :]
    acc = acc + x3_ref[...] * w[_ROW_X3:_ROW_X3 + 1, :]
    # relu6; dropout is inference-mode identity.
    # TODO(synk): torch.dropout(v4) in the reference is missing (p, train)
    # args; treated as inference-mode identity here.
    o_ref[...] = jnp.clip(acc, 0.0, 6.0)


def build_fused_weight(w1, b1, w3, b3):
    """One-time preprocessing: fold both conv-transposes, both biases and the
    x3 broadcast-add into a single (8, 512) weight matrix."""
    # ConvTranspose2d weights are (C_in, C_out, kH, kW); flatten (co, kh, kw).
    w1_flat = w1.reshape(C1_IN, C1_OUT * K * K).astype(jnp.float32)   # (1, 128)
    b1_flat = jnp.repeat(b1.astype(jnp.float32), K * K)               # (128,)
    rep = C3_OUT // C1_OUT                                            # 4
    w1_tiled = jnp.tile(w1_flat, (1, rep))                            # (1, 512)
    b1_tiled = jnp.tile(b1_flat, rep)                                 # (512,)

    w3_flat = w3.reshape(C3_IN, C3_OUT * K * K).astype(jnp.float32)   # (4, 512)
    b3_flat = jnp.repeat(b3.astype(jnp.float32), K * K)               # (512,)

    ones_row = jnp.ones((1, F), jnp.float32)                          # x3 row
    b_comb = (b1_tiled + b3_flat).reshape(1, F)                       # bias row
    pad_row = jnp.zeros((1, F), jnp.float32)                          # layout pad

    return jnp.concatenate([w1_tiled, w3_flat, ones_row, b_comb, pad_row], axis=0)


@jax.jit
def model_forward(x1, x2, x3, w_fused):
    N = x1.shape[0]
    x1f = x1.reshape(N, C1_IN).astype(jnp.float32)
    x2f = x2.reshape(N, C3_IN).astype(jnp.float32)
    x3f = x3.reshape(N, 1).astype(jnp.float32)

    # Row tile: whole batch for small N (block dim == array dim is always
    # legal); otherwise a multiple-of-8 tile so the output writeback is
    # double-buffered and per-step VMEM stays small.
    tm = N if N <= 512 else 512
    grid = (pl.cdiv(N, tm),)

    out_flat = pl.pallas_call(
        _fused_kernel,
        out_shape=jax.ShapeDtypeStruct((N, F), jnp.float32),
        grid=grid,
        in_specs=[
            pl.BlockSpec((tm, C1_IN), lambda i: (i, 0)),
            pl.BlockSpec((tm, C3_IN), lambda i: (i, 0)),
            pl.BlockSpec((tm, 1), lambda i: (i, 0)),
            pl.BlockSpec((8, F), lambda i: (0, 0)),   # weight stays VMEM resident
        ],
        out_specs=pl.BlockSpec((tm, F), lambda i: (i, 0)),
        compiler_params=pltpu.CompilerParams(
            dimension_semantics=("parallel",)),
    )(x1f, x2f, x3f, w_fused)

    return out_flat.reshape(N, C3_OUT, K, K)


def _reference(x1, x2, x3, w1, b1, w3, b3):
    """Plain-JAX reference with the same reconciliation choices."""
    N = x1.shape[0]
    v1 = jnp.einsum("ni,iokl->nokl", x1.reshape(N, C1_IN), w1) + b1[None, :, None, None]
    v2 = jnp.einsum("ni,iokl->nokl", x2.reshape(N, C3_IN), w3) + b3[None, :, None, None]
    v1t = jnp.tile(v1, (1, C3_OUT // C1_OUT, 1, 1))
    v3 = v1t + v2 + x3
    return jnp.clip(v3, 0.0, 6.0)


if __name__ == "__main__":
    key = jax.random.PRNGKey(0)
    ks = jax.random.split(key, 7)
    N = 2

    x1 = jax.random.normal(ks[0], (N, 1, 1, 1), jnp.float32)
    # TODO(synk): original test input x2 had 1 channel (invalid for
    # conv_transpose3); using 4 channels so the layer is well-defined.
    x2 = jax.random.normal(ks[1], (N, 4, 1, 1), jnp.float32)
    x3 = jax.random.normal(ks[2], (N, 1, 1, 1), jnp.float32)

    # Deterministic synthetic parameters (ConvTranspose2d: (C_in, C_out, kH, kW)).
    w1 = 0.1 * jax.random.normal(ks[3], (C1_IN, C1_OUT, K, K), jnp.float32)
    b1 = 0.1 * jax.random.normal(ks[4], (C1_OUT,), jnp.float32)
    w3 = 0.1 * jax.random.normal(ks[5], (C3_IN, C3_OUT, K, K), jnp.float32)
    b3 = 0.1 * jax.random.normal(ks[6], (C3_OUT,), jnp.float32)

    # Hoisted one-time weight preprocessing ("init" time, not per-call).
    w_fused = jax.block_until_ready(build_fused_weight(w1, b1, w3, b3))

    out = model_forward(x1, x2, x3, w_fused)
    out = jax.block_until_ready(out)

    ref = _reference(x1, x2, x3, w1, b1, w3, b3)
    assert out.shape == (N, C3_OUT, K, K), out.shape
    assert jnp.allclose(out, ref, atol=1e-5, rtol=1e-5), "mismatch vs JAX reference"

    print("KERNEL_OK")
</pallas_src>

<mosaic_0001>
module attributes {stable_mosaic.version = 11 : i64} {
  func.func @_fused_kernel(%arg0: i32, %arg1: memref<2x1xf32, #tpu.memory_space<vmem>>, %arg2: memref<2x4xf32, #tpu.memory_space<vmem>>, %arg3: memref<2x1xf32, #tpu.memory_space<vmem>>, %arg4: memref<8x512xf32, #tpu.memory_space<vmem>>, %arg5: memref<2x512xf32, #tpu.memory_space<vmem>>) attributes {dimension_semantics = [#tpu.dimension_semantics<parallel>], iteration_bounds = array<i64: 1>, scalar_prefetch = 0 : i64, scratch_operands = 0 : i64, tpu.core_type = #tpu.core_type<tc>, window_params = [{transform_indices = @transform_0, window_bounds = array<i64: 2, 1>}, {transform_indices = @transform_1, window_bounds = array<i64: 2, 4>}, {transform_indices = @transform_2, window_bounds = array<i64: 2, 1>}, {pipeline_mode = #tpu.pipeline_mode<synchronous>, transform_indices = @transform_3, window_bounds = array<i64: 8, 512>}, {transform_indices = @transform_4, window_bounds = array<i64: 2, 512>}]} {
    %c0 = arith.constant 0 : index
    %c0_0 = arith.constant 0 : index
    %0 = vector.load %arg4[%c0, %c0_0] : memref<8x512xf32, #tpu.memory_space<vmem>>, vector<8x512xf32>
    %1 = vector.extract_strided_slice %0 {offsets = [6, 0], sizes = [1, 512], strides = [1, 1]} : vector<8x512xf32> to vector<1x512xf32>
    %c0_1 = arith.constant 0 : index
    %c0_2 = arith.constant 0 : index
    %2 = vector.load %arg1[%c0_1, %c0_2] : memref<2x1xf32, #tpu.memory_space<vmem>>, vector<2x1xf32>
    %3 = vector.extract_strided_slice %0 {offsets = [0, 0], sizes = [1, 512], strides = [1, 1]} : vector<8x512xf32> to vector<1x512xf32>
    %4 = vector.broadcast %2 : vector<2x1xf32> to vector<2x512xf32>
    %5 = vector.broadcast %3 : vector<1x512xf32> to vector<2x512xf32>
    %6 = arith.mulf %4, %5 : vector<2x512xf32>
    %7 = vector.broadcast %1 : vector<1x512xf32> to vector<2x512xf32>
    %8 = arith.addf %7, %6 : vector<2x512xf32>
    %c0_3 = arith.constant 0 : index
    %c0_4 = arith.constant 0 : index
    %9 = vector.load %arg2[%c0_3, %c0_4] : memref<2x4xf32, #tpu.memory_space<vmem>>, vector<2x4xf32>
    %10 = vector.extract_strided_slice %9 {offsets = [0, 0], sizes = [2, 1], strides = [1, 1]} : vector<2x4xf32> to vector<2x1xf32>
    %11 = vector.extract_strided_slice %0 {offsets = [1, 0], sizes = [1, 512], strides = [1, 1]} : vector<8x512xf32> to vector<1x512xf32>
    %12 = vector.broadcast %10 : vector<2x1xf32> to vector<2x512xf32>
    %13 = vector.broadcast %11 : vector<1x512xf32> to vector<2x512xf32>
    %14 = arith.mulf %12, %13 : vector<2x512xf32>
    %15 = arith.addf %8, %14 : vector<2x512xf32>
    %16 = vector.extract_strided_slice %9 {offsets = [0, 1], sizes = [2, 1], strides = [1, 1]} : vector<2x4xf32> to vector<2x1xf32>
    %17 = vector.extract_strided_slice %0 {offsets = [2, 0], sizes = [1, 512], strides = [1, 1]} : vector<8x512xf32> to vector<1x512xf32>
    %18 = vector.broadcast %16 : vector<2x1xf32> to vector<2x512xf32>
    %19 = vector.broadcast %17 : vector<1x512xf32> to vector<2x512xf32>
    %20 = arith.mulf %18, %19 : vector<2x512xf32>
    %21 = arith.addf %15, %20 : vector<2x512xf32>
    %22 = vector.extract_strided_slice %9 {offsets = [0, 2], sizes = [2, 1], strides = [1, 1]} : vector<2x4xf32> to vector<2x1xf32>
    %23 = vector.extract_strided_slice %0 {offsets = [3, 0], sizes = [1, 512], strides = [1, 1]} : vector<8x512xf32> to vector<1x512xf32>
    %24 = vector.broadcast %22 : vector<2x1xf32> to vector<2x512xf32>
    %25 = vector.broadcast %23 : vector<1x512xf32> to vector<2x512xf32>
    %26 = arith.mulf %24, %25 : vector<2x512xf32>
    %27 = arith.addf %21, %26 : vector<2x512xf32>
    %28 = vector.extract_strided_slice %9 {offsets = [0, 3], sizes = [2, 1], strides = [1, 1]} : vector<2x4xf32> to vector<2x1xf32>
    %29 = vector.extract_strided_slice %0 {offsets = [4, 0], sizes = [1, 512], strides = [1, 1]} : vector<8x512xf32> to vector<1x512xf32>
    %30 = vector.broadcast %28 : vector<2x1xf32> to vector<2x512xf32>
    %31 = vector.broadcast %29 : vector<1x512xf32> to vector<2x512xf32>
    %32 = arith.mulf %30, %31 : vector<2x512xf32>
    %33 = arith.addf %27, %32 : vector<2x512xf32>
    %c0_5 = arith.constant 0 : index
    %c0_6 = arith.constant 0 : index
    %34 = vector.load %arg3[%c0_5, %c0_6] : memref<2x1xf32, #tpu.memory_space<vmem>>, vector<2x1xf32>
    %35 = vector.extract_strided_slice %0 {offsets = [5, 0], sizes = [1, 512], strides = [1, 1]} : vector<8x512xf32> to vector<1x512xf32>
    %36 = vector.broadcast %34 : vector<2x1xf32> to vector<2x512xf32>
    %37 = vector.broadcast %35 : vector<1x512xf32> to vector<2x512xf32>
    %38 = arith.mulf %36, %37 : vector<2x512xf32>
    %39 = arith.addf %33, %38 : vector<2x512xf32>
    %cst = arith.constant 0.000000e+00 : f32
    %cst_7 = arith.constant 6.000000e+00 : f32
    %40 = vector.broadcast %cst : f32 to vector<2x512xf32>
    %41 = arith.maximumf %40, %39 : vector<2x512xf32>
    %42 = vector.broadcast %cst_7 : f32 to vector<2x512xf32>
    %43 = arith.minimumf %42, %41 : vector<2x512xf32>
    %c0_8 = arith.constant 0 : index
    %c0_9 = arith.constant 0 : index
    %44 = vector.load %arg5[%c0_8, %c0_9] : memref<2x512xf32, #tpu.memory_space<vmem>>, vector<2x512xf32>
    tpu.vector_store %arg5[%c0_8, %c0_9], %43 {strides = array<i32>} : memref<2x512xf32, #tpu.memory_space<vmem>>, vector<2x512xf32>,
    return
  }
  func.func @transform_0(%arg0: i32) -> (i32, i32) {
    %c0_i32 = arith.constant 0 : i32
    %c0_i32_0 = arith.constant 0 : i32
    return %arg0, %c0_i32 : i32, i32
  }
  func.func @transform_1(%arg0: i32) -> (i32, i32) {
    %c0_i32 = arith.constant 0 : i32
    %c0_i32_0 = arith.constant 0 : i32
    return %arg0, %c0_i32 : i32, i32
  }
  func.func @transform_2(%arg0: i32) -> (i32, i32) {
    %c0_i32 = arith.constant 0 : i32
    %c0_i32_0 = arith.constant 0 : i32
    return %arg0, %c0_i32 : i32, i32
  }
  func.func @transform_3(%arg0: i32) -> (i32, i32) {
    %c0_i32 = arith.constant 0 : i32
    %c0_i32_0 = arith.constant 0 : i32
    %c0_i32_1 = arith.constant 0 : i32
    return %c0_i32, %c0_i32_0 : i32, i32
  }
  func.func @transform_4(%arg0: i32) -> (i32, i32) {
    %c0_i32 = arith.constant 0 : i32
    %c0_i32_0 = arith.constant 0 : i32
    return %arg0, %c0_i32 : i32, i32
  }
}

</mosaic_0001>

<llo_original>
// kernel: model_forward.1
$region0: #{model_forward.1}
  #allocation0 [shape = 'u32[]', space=smem, size = 0x4, offset = 0x4, fixed_abs, tag = 'smem constant byte address 0x4 - core index']
  #allocation1 [shape = 'u32[72,128]{1,0:T(1,128)}', space=vmem, size = 0x9000, scoped, tag = 'internal scratch']
  %s0 = inlined_call_operand.vmem [shape: f32[2,1], index: 0, kind: input, shape index: {}]
  %s1 = inlined_call_operand.vmem [shape: f32[2,4], index: 1, kind: input, shape index: {}]
  %s2 = inlined_call_operand.vmem [shape: f32[2,1], index: 2, kind: input, shape index: {}]
  %s3 = inlined_call_operand.hbm [shape: f32[8,512], index: 3, kind: input, shape index: {}]
  %s4 = inlined_call_operand.vmem [shape: f32[2,512], index: 4, kind: output, shape index: {}]
  %s5 = sld [smem:[#allocation0]]
  $region30: #{model_forward.1} parent=0
    _
  %s7 = ssub.s32 1, %s5
  %s8 = scalar_select 0, %s7, %s5
  $region1: #{model_forward.1} parent=0
    #allocation2 [shape = 'u8[16384]{0}', space=vmem, size = 0x4000, scoped, tag = 'input window, operand 3, single buffered']
    #allocation3 [shape = 's32[1]{0}', space=sflag, size = 0x4, scoped, tag = 'scoped memory for model_forward.1']
    %9 = vsyncpa [#allocation3], 0
    // Predicated region
    $region2: #{model_forward.1} parent=1 // pred_check
      _
    $region3: #{model_forward.1} parent=1 // pred_check_branch
      %11 = sbr.rel (0) target = $region5
    $region4: #{model_forward.1} parent=1 // pred_region
      _
    $region5: #{model_forward.1} parent=1 // pred_fallthru
      _
    // Predicated region
    $region6: #{model_forward.1} parent=1 // pred_check
      _
    $region7: #{model_forward.1} parent=1 // pred_check_branch
      %13 = sbr.rel (0) target = $region9
    $region8: #{model_forward.1} parent=1 // pred_region
      _
    $region9: #{model_forward.1} parent=1 // pred_fallthru
      _
    // Predicated region
    $region10: #{model_forward.1} parent=1 // pred_check
      _
    $region11: #{model_forward.1} parent=1 // pred_check_branch
      %15 = sbr.rel (0) target = $region13
    $region12: #{model_forward.1} parent=1 // pred_region
      _
    $region13: #{model_forward.1} parent=1 // pred_fallthru
      _
    // Predicated region
    $region14: #{model_forward.1} parent=1 // pred_check
      _
    $region15: #{model_forward.1} parent=1 // pred_check_branch
      %17 = sbr.rel (0) target = $region17
    $region16: #{model_forward.1} parent=1 // pred_region
      %19 = vsyncadd [#allocation3], 0
      %s21 = sshll.u32 %s3, 4
      %s22 = int_to_ptr.hbm [resolvable:$true] %s21
      %s23 = sshll.u32 [#allocation2], 4
      %s24 = int_to_ptr.vmem [resolvable:$true] %s23
      %26 = dma.hbm_to_vmem [thread:$0]  %s22, 512, %s24, [#allocation3]
    $region17: #{model_forward.1} parent=1 // pred_fallthru
      _
    // Predicated region
    $region18: #{model_forward.1} parent=1 // pred_check
      _
    $region19: #{model_forward.1} parent=1 // pred_check_branch
      %28 = sbr.rel (0) target = $region21
    $region20: #{model_forward.1} parent=1 // pred_region
      %30 = dma.done [#allocation3], 512
    $region21: #{model_forward.1} parent=1 // pred_fallthru
      _
    %v31 = vld [vmem:[#allocation2] sm:$0xff]
    %v32 = vld [vmem:[#allocation2 + $0x8] sm:$0xff]
    %v33 = vld [vmem:[#allocation2 + $0x10] sm:$0xff]
    %v34 = vld [vmem:[#allocation2 + $0x18] sm:$0xff]
    %v35 = vld [vmem:[%s0] sm:$0x3]
    %37 = vset.pattern.permute.xlu0 0
    %38 = vperm.xlu0 %37, %v35
    %v39 = vpop.permute.xlu0 %38
    %v41 = vperm.slane %v31, 0
    %v42 = vperm.slane %v32, 0
    %v43 = vperm.slane %v33, 0
    %v44 = vperm.slane %v34, 0
    %v45 = vmul.f32 %v39, %v41
    %v46 = vmul.f32 %v39, %v42
    %v47 = vmul.f32 %v39, %v43
    %v48 = vmul.f32 %v39, %v44
    %v49 = vperm.slane %v31, 6
    %v50 = vperm.slane %v32, 6
    %v51 = vperm.slane %v33, 6
    %v52 = vperm.slane %v34, 6
    %v53 = vadd.f32 %v49, %v45
    %v54 = vadd.f32 %v50, %v46
    %v55 = vadd.f32 %v51, %v47
    %v56 = vadd.f32 %v52, %v48
    %v57 = vld [vmem:[%s1] sm:$0x3]
    %59 = vset.pattern.permute.xlu0 0
    %60 = vperm.xlu0 %59, %v57
    %v61 = vpop.permute.xlu0 %60
    %v63 = vperm.slane %v31, 1
    %v64 = vperm.slane %v32, 1
    %v65 = vperm.slane %v33, 1
    %v66 = vperm.slane %v34, 1
    %v67 = vmul.f32 %v61, %v63
    %v68 = vmul.f32 %v61, %v64
    %v69 = vmul.f32 %v61, %v65
    %v70 = vmul.f32 %v61, %v66
    %v71 = vadd.f32 %v53, %v67
    %v72 = vadd.f32 %v54, %v68
    %v73 = vadd.f32 %v55, %v69
    %v74 = vadd.f32 %v56, %v70
    %75 = vset.pattern.permute.xlu0 1
    %76 = vperm.xlu0 %75, %v57
    %v77 = vpop.permute.xlu0 %76
    %v79 = vperm.slane %v31, 2
    %v80 = vperm.slane %v32, 2
    %v81 = vperm.slane %v33, 2
    %v82 = vperm.slane %v34, 2
    %v83 = vmul.f32 %v77, %v79
    %v84 = vmul.f32 %v77, %v80
    %v85 = vmul.f32 %v77, %v81
    %v86 = vmul.f32 %v77, %v82
    %v87 = vadd.f32 %v71, %v83
    %v88 = vadd.f32 %v72, %v84
    %v89 = vadd.f32 %v73, %v85
    %v90 = vadd.f32 %v74, %v86
    %91 = vset.pattern.permute.xlu0 2
    %92 = vperm.xlu0 %91, %v57
    %v93 = vpop.permute.xlu0 %92
    %v95 = vperm.slane %v31, 3
    %v96 = vperm.slane %v32, 3
    %v97 = vperm.slane %v33, 3
    %v98 = vperm.slane %v34, 3
    %v99 = vmul.f32 %v93, %v95
    %v100 = vmul.f32 %v93, %v96
    %v101 = vmul.f32 %v93, %v97
    %v102 = vmul.f32 %v93, %v98
    %v103 = vadd.f32 %v87, %v99
    %v104 = vadd.f32 %v88, %v100
    %v105 = vadd.f32 %v89, %v101
    %v106 = vadd.f32 %v90, %v102
    %107 = vset.pattern.permute.xlu0 3
    %108 = vperm.xlu0 %107, %v57
    %v109 = vpop.permute.xlu0 %108
    %v111 = vperm.slane %v31, 4
    %v112 = vperm.slane %v32, 4
    %v113 = vperm.slane %v33, 4
    %v114 = vperm.slane %v34, 4
    %v115 = vmul.f32 %v109, %v111
    %v116 = vmul.f32 %v109, %v112
    %v117 = vmul.f32 %v109, %v113
    %v118 = vmul.f32 %v109, %v114
    %v119 = vadd.f32 %v103, %v115
    %v120 = vadd.f32 %v104, %v116
    %v121 = vadd.f32 %v105, %v117
    %v122 = vadd.f32 %v106, %v118
    %v123 = vld [vmem:[%s2] sm:$0x3]
    %125 = vset.pattern.permute.xlu0 0
    %126 = vperm.xlu0 %125, %v123
    %v127 = vpop.permute.xlu0 %126
    %v129 = vperm.slane %v31, 5
    %v130 = vperm.slane %v32, 5
    %v131 = vperm.slane %v33, 5
    %v132 = vperm.slane %v34, 5
    %v133 = vmul.f32 %v127, %v129
    %v134 = vmul.f32 %v127, %v130
    %v135 = vmul.f32 %v127, %v131
    %v136 = vmul.f32 %v127, %v132
    %v137 = vadd.f32 %v119, %v133
    %v138 = vadd.f32 %v120, %v134
    %v139 = vadd.f32 %v121, %v135
    %v140 = vadd.f32 %v122, %v136
    %v141 = vmax.f32 %v137, 0.0
    %v142 = vmax.f32 %v138, 0.0
    %v143 = vmax.f32 %v139, 0.0
    %v144 = vmax.f32 %v140, 0.0
    %v145 = vmin.f32 %v141, 6.0
    %v146 = vmin.f32 %v142, 6.0
    %v147 = vmin.f32 %v143, 6.0
    %v148 = vmin.f32 %v144, 6.0
    %v153 = vrot.slane %v146, 6
    %v154 = vrot.slane %v147, 4
    %v155 = vrot.slane %v148, 2
    %vm156 = vcmask 1041408
    %v157 = vsel %vm156, %v145, %v153
    %vm158 = vcmask 1045508
    %v159 = vsel %vm158, %v154, %v155
    %vm160 = vcmask 1043456
    %v161 = vsel %vm160, %v157, %v159
    %163 = vst [vmem:[%s4] sm:$0xff] %v161
    // Predicated region
    $region22: #{model_forward.1} parent=1 // pred_check
      _
    $region23: #{model_forward.1} parent=1 // pred_check_branch
      %165 = sbr.rel (0) target = $region25
    $region24: #{model_forward.1} parent=1 // pred_region
      _
    $region25: #{model_forward.1} parent=1 // pred_fallthru
      _
    // Predicated region
    $region26: #{model_forward.1} parent=1 // pred_check
      _
    $region27: #{model_forward.1} parent=1 // pred_check_branch
      %167 = sbr.rel (0) target = $region29
    $region28: #{model_forward.1} parent=1 // pred_region
      _
    $region29: #{model_forward.1} parent=1 // pred_fallthru
      _
    %168 = vsyncpa [#allocation3], 1

</llo_original>
